<compile_context>
chip_gen: v5e
topology: v5e:2x2
jax: 0.10.0
libtpu: 0.0.40
codegen_flags: <defaults>
</compile_context>

<pallas_src>
import functools

import numpy as np
import jax
import jax.numpy as jnp
from jax.experimental import pallas as pl
from jax.experimental.pallas import tpu as pltpu

HIDDEN = 256


def value_kernel(x_ref, w1_ref, b1_ref, w2_ref, b2_ref, w3_ref, b3_ref, o_ref):
    # x:  (TB, D)      compute dtype (f32 or bf16)
    # w1: (D, 256)     compute dtype     b1: (1, 256) f32
    # w2: (256, 256)   compute dtype     b2: (1, 256) f32
    # w3: (1, 256)     f32 head row      b3: (1, 1)   f32 scalar (SMEM)
    # o:  (TB, 1)      f32
    cdt = w1_ref.dtype

    a1 = jnp.dot(x_ref[...], w1_ref[...],
                 preferred_element_type=jnp.float32) + b1_ref[...]
    h1 = jnp.tanh(a1.astype(cdt))        # bf16 tanh on the bf16 path (v6e/v7x EUP)

    a2 = jnp.dot(h1, w2_ref[...],
                 preferred_element_type=jnp.float32) + b2_ref[...]
    h2 = jnp.tanh(a2.astype(cdt))

    # Scalar head: VPU multiply + XLU lane-reduce in f32 instead of a 1-wide
    # (previously 128-lane padded) MXU matmul -- saves ~1/3 of the MXU work and
    # keeps the output a single lane wide.
    v = jnp.sum(h2.astype(jnp.float32) * w3_ref[...], axis=-1, keepdims=True)
    o_ref[...] = (v + b3_ref[0, 0]).astype(o_ref.dtype)


def _round_up(x, m):
    return ((x + m - 1) // m) * m


def prepare_value_params(params, *, use_bf16=False):
    """One-time weight prep (hoisted out of the per-call path).

    params: (w1[D,256], b1, w2[256,256], b2, w3[256,1], b3) as produced by
            init_value_params (weights stored [in, out]).
    use_bf16: cast matmul operands (W1, W2) to bf16 (fast path on all
              generations, biggest win on v5e); biases and the scalar head
              stay f32, matmul accumulation stays f32.
    """
    w1, b1, w2, b2, w3, b3 = params
    cdt = jnp.bfloat16 if use_bf16 else jnp.float32
    return (
        w1.astype(cdt),
        jnp.asarray(b1, jnp.float32).reshape(1, HIDDEN),
        w2.astype(cdt),
        jnp.asarray(b2, jnp.float32).reshape(1, HIDDEN),
        jnp.asarray(w3, jnp.float32).reshape(1, HIDDEN),   # head as a (1,256) row
        jnp.asarray(b3, jnp.float32).reshape(1, 1),
    )


@functools.partial(jax.jit, static_argnames=("tb",))
def value_forward(states, prepared_params, *, tb=1024):
    """states: [B, D] -> value estimates [B] float32.

    prepared_params: output of prepare_value_params (build once, reuse).
    tb: max batch tile (multiple of 128).  It is capped so the grid keeps >=2
        steps when the batch is big enough (v7x megacore) and collapses to a
        single step for tiny batches.
    """
    assert tb % 128 == 0, "batch tile must be a multiple of 128"
    w1, b1, w2, b2, w3_row, b3 = prepared_params
    B, D = states.shape

    x = states.astype(w1.dtype)

    b128 = _round_up(B, 128)
    # Keep >=2 grid steps when possible so both v7x TensorCores get work.
    half = _round_up(-(-b128 // 2), 128) if b128 > 128 else 128
    tb_eff = max(128, min(tb, half))
    b_pad = _round_up(B, tb_eff)
    if b_pad != B:
        x = jnp.pad(x, ((0, b_pad - B), (0, 0)))

    # VMEM at tb=1024 (f32 path): x/out double-buffers + h1/h2 temporaries +
    # resident weights ~ 5-6 MiB -- well under the default scoped limit on
    # v5e/v6e/v7x, so no explicit vmem_limit_bytes is needed.
    out = pl.pallas_call(
        value_kernel,
        out_shape=jax.ShapeDtypeStruct((b_pad, 1), jnp.float32),
        grid_spec=pl.GridSpec(
            grid=(b_pad // tb_eff,),
            in_specs=[
                pl.BlockSpec((tb_eff, D), lambda i: (i, 0)),        # streamed batch tile
                pl.BlockSpec((D, HIDDEN), lambda i: (0, 0)),        # W1 (resident)
                pl.BlockSpec((1, HIDDEN), lambda i: (0, 0)),        # b1 (f32)
                pl.BlockSpec((HIDDEN, HIDDEN), lambda i: (0, 0)),   # W2 (resident)
                pl.BlockSpec((1, HIDDEN), lambda i: (0, 0)),        # b2 (f32)
                pl.BlockSpec((1, HIDDEN), lambda i: (0, 0)),        # w3 head row (f32)
                pl.BlockSpec(memory_space=pltpu.MemorySpace.SMEM),  # b3 scalar
            ],
            out_specs=pl.BlockSpec((tb_eff, 1), lambda i: (i, 0)),
        ),
        compiler_params=pltpu.CompilerParams(
            dimension_semantics=("parallel",),
        ),
    )(x, w1, b1, w2, b2, w3_row, b3)

    # nn.Module does .squeeze(-1); drop batch padding.
    return out[:B, 0]


def init_value_params(key, state_dim):
    """Deterministic init matching the module: orthogonal(gain=sqrt(2)) weights,
    zero biases. Weights stored as [in, out]."""
    orth = jax.nn.initializers.orthogonal(scale=float(np.sqrt(2.0)))
    k1, k2, k3 = jax.random.split(key, 3)
    w1 = orth(k1, (state_dim, HIDDEN), jnp.float32)
    b1 = jnp.zeros((1, HIDDEN), jnp.float32)
    w2 = orth(k2, (HIDDEN, HIDDEN), jnp.float32)
    b2 = jnp.zeros((1, HIDDEN), jnp.float32)
    w3 = orth(k3, (HIDDEN, 1), jnp.float32)
    b3 = jnp.zeros((1, 1), jnp.float32)
    return (w1, b1, w2, b2, w3, b3)


def value_forward_ref(states, params):
    """Pure-JAX reference for correctness checking."""
    w1, b1, w2, b2, w3, b3 = params
    h1 = jnp.tanh(states @ w1 + b1)
    h2 = jnp.tanh(h1 @ w2 + b2)
    return (h2 @ w3 + b3)[:, 0]


if __name__ == "__main__":
    key = jax.random.PRNGKey(0)
    kp, kx = jax.random.split(key)

    B, STATE_DIM = 8, 32
    params = init_value_params(kp, STATE_DIM)
    prepared = prepare_value_params(params)              # f32 path, prepped once

    states = jax.random.normal(kx, (B, STATE_DIM), jnp.float32)
    out = jax.block_until_ready(value_forward(states, prepared))
    ref = value_forward_ref(states, params)
    assert out.shape == (B,), out.shape
    np.testing.assert_allclose(np.asarray(out), np.asarray(ref), rtol=1e-5, atol=1e-5)

    # Batch not a multiple of the tile (padding path) spanning >=2 grid steps.
    B2 = 300
    states2 = jax.random.normal(jax.random.PRNGKey(1), (B2, STATE_DIM), jnp.float32)
    out2 = jax.block_until_ready(value_forward(states2, prepared))
    ref2 = value_forward_ref(states2, params)
    np.testing.assert_allclose(np.asarray(out2), np.asarray(ref2), rtol=1e-5, atol=1e-5)

    # Large batch exercising the default 1024-row tile (multi-step grid).
    B3 = 3000
    states3 = jax.random.normal(jax.random.PRNGKey(2), (B3, STATE_DIM), jnp.float32)
    out3 = jax.block_until_ready(value_forward(states3, prepared))
    ref3 = value_forward_ref(states3, params)
    np.testing.assert_allclose(np.asarray(out3), np.asarray(ref3), rtol=1e-5, atol=1e-5)

    # bf16 fast path (biggest win on v5e); relaxed tolerance vs the f32 reference.
    prepared_bf16 = prepare_value_params(params, use_bf16=True)
    out_bf16 = jax.block_until_ready(value_forward(states3, prepared_bf16))
    np.testing.assert_allclose(np.asarray(out_bf16), np.asarray(ref3), rtol=0.05, atol=0.2)

    print("KERNEL_OK")
</pallas_src>

<mosaic_0001>
module attributes {stable_mosaic.version = 11 : i64} {
  func.func @value_kernel(%arg0: i32, %arg1: memref<128x32xf32, #tpu.memory_space<vmem>>, %arg2: memref<32x256xf32, #tpu.memory_space<vmem>>, %arg3: memref<1x256xf32, #tpu.memory_space<vmem>>, %arg4: memref<256x256xf32, #tpu.memory_space<vmem>>, %arg5: memref<1x256xf32, #tpu.memory_space<vmem>>, %arg6: memref<1x256xf32, #tpu.memory_space<vmem>>, %arg7: memref<1x1xf32, #tpu.memory_space<smem>>, %arg8: memref<128x1xf32, #tpu.memory_space<vmem>>) attributes {dimension_semantics = [#tpu.dimension_semantics<parallel>], iteration_bounds = array<i64: 1>, scalar_prefetch = 0 : i64, scratch_operands = 0 : i64, tpu.core_type = #tpu.core_type<tc>, window_params = [{transform_indices = @transform_0, window_bounds = array<i64: 128, 32>}, {pipeline_mode = #tpu.pipeline_mode<synchronous>, transform_indices = @transform_1, window_bounds = array<i64: 32, 256>}, {pipeline_mode = #tpu.pipeline_mode<synchronous>, transform_indices = @transform_2, window_bounds = array<i64: 1, 256>}, {pipeline_mode = #tpu.pipeline_mode<synchronous>, transform_indices = @transform_3, window_bounds = array<i64: 256, 256>}, {pipeline_mode = #tpu.pipeline_mode<synchronous>, transform_indices = @transform_4, window_bounds = array<i64: 1, 256>}, {pipeline_mode = #tpu.pipeline_mode<synchronous>, transform_indices = @transform_5, window_bounds = array<i64: 1, 256>}, {transform_indices = @transform_6, window_bounds = array<i64: 1, 1>}, {transform_indices = @transform_7, window_bounds = array<i64: 128, 1>}]} {
    %c0 = arith.constant 0 : index
    %c0_0 = arith.constant 0 : index
    %0 = vector.load %arg1[%c0, %c0_0] : memref<128x32xf32, #tpu.memory_space<vmem>>, vector<128x32xf32>
    %c0_1 = arith.constant 0 : index
    %c0_2 = arith.constant 0 : index
    %1 = vector.load %arg2[%c0_1, %c0_2] : memref<32x256xf32, #tpu.memory_space<vmem>>, vector<32x256xf32>
    %cst = arith.constant dense<0.000000e+00> : vector<128x256xf32>
    %2 = tpu.matmul %0, %1, %cst {dimension_numbers = #tpu.dot_dimension_numbers<[1], [0], [0], [1], [0, 0, 1, 1], [], []>} : vector<128x32xf32>, vector<32x256xf32>, vector<128x256xf32> -> vector<128x256xf32>
    %c0_3 = arith.constant 0 : index
    %c0_4 = arith.constant 0 : index
    %3 = vector.load %arg3[%c0_3, %c0_4] : memref<1x256xf32, #tpu.memory_space<vmem>>, vector<1x256xf32>
    %4 = vector.broadcast %3 : vector<1x256xf32> to vector<128x256xf32>
    %5 = arith.addf %2, %4 : vector<128x256xf32>
    %6 = math.tanh %5 : vector<128x256xf32>
    %c0_5 = arith.constant 0 : index
    %c0_6 = arith.constant 0 : index
    %7 = vector.load %arg4[%c0_5, %c0_6] : memref<256x256xf32, #tpu.memory_space<vmem>>, vector<256x256xf32>
    %cst_7 = arith.constant dense<0.000000e+00> : vector<128x256xf32>
    %8 = tpu.matmul %6, %7, %cst_7 {dimension_numbers = #tpu.dot_dimension_numbers<[1], [0], [0], [1], [0, 0, 1, 1], [], []>} : vector<128x256xf32>, vector<256x256xf32>, vector<128x256xf32> -> vector<128x256xf32>
    %c0_8 = arith.constant 0 : index
    %c0_9 = arith.constant 0 : index
    %9 = vector.load %arg5[%c0_8, %c0_9] : memref<1x256xf32, #tpu.memory_space<vmem>>, vector<1x256xf32>
    %10 = vector.broadcast %9 : vector<1x256xf32> to vector<128x256xf32>
    %11 = arith.addf %8, %10 : vector<128x256xf32>
    %12 = math.tanh %11 : vector<128x256xf32>
    %c0_10 = arith.constant 0 : index
    %c0_11 = arith.constant 0 : index
    %13 = vector.load %arg6[%c0_10, %c0_11] : memref<1x256xf32, #tpu.memory_space<vmem>>, vector<1x256xf32>
    %14 = vector.broadcast %13 : vector<1x256xf32> to vector<128x256xf32>
    %15 = arith.mulf %12, %14 : vector<128x256xf32>
    %cst_12 = arith.constant dense<0.000000e+00> : vector<128xf32>
    %16 = vector.multi_reduction <add>, %15, %cst_12 [1] : vector<128x256xf32> to vector<128xf32>
    %17 = vector.shape_cast %16 : vector<128xf32> to vector<128x1xf32>
    %c0_13 = arith.constant 0 : index
    %c0_14 = arith.constant 0 : index
    %18 = memref.load %arg7[%c0_13, %c0_14] : memref<1x1xf32, #tpu.memory_space<smem>>
    %19 = vector.broadcast %18 : f32 to vector<128x1xf32>
    %20 = arith.addf %17, %19 : vector<128x1xf32>
    %c0_15 = arith.constant 0 : index
    %c0_16 = arith.constant 0 : index
    %21 = vector.load %arg8[%c0_15, %c0_16] : memref<128x1xf32, #tpu.memory_space<vmem>>, vector<128x1xf32>
    tpu.vector_store %arg8[%c0_15, %c0_16], %20 {strides = array<i32>} : memref<128x1xf32, #tpu.memory_space<vmem>>, vector<128x1xf32>,
    return
  }
  func.func @transform_0(%arg0: i32) -> (i32, i32) {
    %c0_i32 = arith.constant 0 : i32
    %c0_i32_0 = arith.constant 0 : i32
    return %arg0, %c0_i32 : i32, i32
  }
  func.func @transform_1(%arg0: i32) -> (i32, i32) {
    %c0_i32 = arith.constant 0 : i32
    %c0_i32_0 = arith.constant 0 : i32
    %c0_i32_1 = arith.constant 0 : i32
    return %c0_i32, %c0_i32_0 : i32, i32
  }
  func.func @transform_2(%arg0: i32) -> (i32, i32) {
    %c0_i32 = arith.constant 0 : i32
    %c0_i32_0 = arith.constant 0 : i32
    %c0_i32_1 = arith.constant 0 : i32
    return %c0_i32, %c0_i32_0 : i32, i32
  }
  func.func @transform_3(%arg0: i32) -> (i32, i32) {
    %c0_i32 = arith.constant 0 : i32
    %c0_i32_0 = arith.constant 0 : i32
    %c0_i32_1 = arith.constant 0 : i32
    return %c0_i32, %c0_i32_0 : i32, i32
  }
  func.func @transform_4(%arg0: i32) -> (i32, i32) {
    %c0_i32 = arith.constant 0 : i32
    %c0_i32_0 = arith.constant 0 : i32
    %c0_i32_1 = arith.constant 0 : i32
    return %c0_i32, %c0_i32_0 : i32, i32
  }
  func.func @transform_5(%arg0: i32) -> (i32, i32) {
    %c0_i32 = arith.constant 0 : i32
    %c0_i32_0 = arith.constant 0 : i32
    %c0_i32_1 = arith.constant 0 : i32
    return %c0_i32, %c0_i32_0 : i32, i32
  }
  func.func @transform_6(%arg0: i32) -> (i32, i32) {
    %c0_i32 = arith.constant 0 : i32
    %c0_i32_0 = arith.constant 0 : i32
    %c0_i32_1 = arith.constant 0 : i32
    return %c0_i32, %c0_i32_0 : i32, i32
  }
  func.func @transform_7(%arg0: i32) -> (i32, i32) {
    %c0_i32 = arith.constant 0 : i32
    %c0_i32_0 = arith.constant 0 : i32
    return %arg0, %c0_i32 : i32, i32
  }
}

</mosaic_0001>

<llo_original>
// kernel: value_forward.1
$region0: #{value_forward.1}
  #allocation0 [shape = 'u32[]', space=smem, size = 0x4, offset = 0x4, fixed_abs, tag = 'smem constant byte address 0x4 - core index']
  #allocation1 [shape = 'u32[72,128]{1,0:T(1,128)}', space=vmem, size = 0x9000, scoped, tag = 'internal scratch']
  #allocation2 [shape = 'f32[1,1]{1,0:T(1,128)S(6)}', space=smem, size = 0x200, scoped, tag = 'scoped memory for value_forward.1']
  %s0 = inlined_call_operand.vmem [shape: f32[128,32], index: 0, kind: input, shape index: {}]
  %s1 = inlined_call_operand.vmem [shape: f32[32,256], index: 1, kind: input, shape index: {}]
  %s2 = inlined_call_operand.vmem [shape: f32[1,256], index: 2, kind: input, shape index: {}]
  %s3 = inlined_call_operand.hbm [shape: f32[256,256], index: 3, kind: input, shape index: {}]
  %s4 = inlined_call_operand.vmem [shape: f32[1,256], index: 4, kind: input, shape index: {}]
  %s5 = inlined_call_operand.vmem [shape: f32[1,256], index: 5, kind: input, shape index: {}]
  %s6 = inlined_call_operand.<no memory space> [shape: f32[1,1], index: 6, kind: input, shape index: {}]
  %s7 = inlined_call_operand.vmem [shape: f32[128,1], index: 7, kind: output, shape index: {}]
  %s8 = sld [smem:[#allocation0]]
  $region42: #{value_forward.1} parent=0
    _
  %s10 = ssub.s32 1, %s8
  %s11 = scalar_select 0, %s10, %s8
  %12 = sst [smem:[#allocation2]] %s6
  $region1: #{value_forward.1} parent=0
    #allocation3 [shape = 'u8[262144]{0}', space=vmem, size = 0x40000, scoped, tag = 'input window, operand 3, single buffered']
    #allocation4 [shape = 's32[1]{0}', space=sflag, size = 0x4, scoped, tag = 'scoped memory for value_forward.1']
    %13 = vsyncpa [#allocation4], 0
    // Predicated region
    $region2: #{value_forward.1} parent=1 // pred_check
      _
    $region3: #{value_forward.1} parent=1 // pred_check_branch
      %15 = sbr.rel (0) target = $region5
    $region4: #{value_forward.1} parent=1 // pred_region
      _
    $region5: #{value_forward.1} parent=1 // pred_fallthru
      _
    // Predicated region
    $region6: #{value_forward.1} parent=1 // pred_check
      _
    $region7: #{value_forward.1} parent=1 // pred_check_branch
      %17 = sbr.rel (0) target = $region9
    $region8: #{value_forward.1} parent=1 // pred_region
      _
    $region9: #{value_forward.1} parent=1 // pred_fallthru
      _
    // Predicated region
    $region10: #{value_forward.1} parent=1 // pred_check
      _
    $region11: #{value_forward.1} parent=1 // pred_check_branch
      %19 = sbr.rel (0) target = $region13
    $region12: #{value_forward.1} parent=1 // pred_region
      _
    $region13: #{value_forward.1} parent=1 // pred_fallthru
      _
    // Predicated region
    $region14: #{value_forward.1} parent=1 // pred_check
      _
    $region15: #{value_forward.1} parent=1 // pred_check_branch
      %21 = sbr.rel (0) target = $region17
    $region16: #{value_forward.1} parent=1 // pred_region
      %23 = vsyncadd [#allocation4], 0
      %s24 = sshll.u32 %s3, 4
      %s25 = int_to_ptr.hbm [resolvable:$true] %s24
      %s26 = sshll.u32 [#allocation3], 4
      %s27 = int_to_ptr.vmem [resolvable:$true] %s26
      %32 = dma.hbm_to_vmem [thread:$0]  %s25, 8192, %s27, [#allocation4], 256, 256, 16
    $region17: #{value_forward.1} parent=1 // pred_fallthru
      _
    // Predicated region
    $region18: #{value_forward.1} parent=1 // pred_check
      _
    $region19: #{value_forward.1} parent=1 // pred_check_branch
      %34 = sbr.rel (0) target = $region21
    $region20: #{value_forward.1} parent=1 // pred_region
      _
    $region21: #{value_forward.1} parent=1 // pred_fallthru
      _
    // Predicated region
    $region22: #{value_forward.1} parent=1 // pred_check
      _
    $region23: #{value_forward.1} parent=1 // pred_check_branch
      %36 = sbr.rel (0) target = $region25
    $region24: #{value_forward.1} parent=1 // pred_region
      _
    $region25: #{value_forward.1} parent=1 // pred_fallthru
      _
    // Predicated region
    $region26: #{value_forward.1} parent=1 // pred_check
      _
    $region27: #{value_forward.1} parent=1 // pred_check_branch
      %38 = sbr.rel (0) target = $region29
    $region28: #{value_forward.1} parent=1 // pred_region
      _
    $region29: #{value_forward.1} parent=1 // pred_fallthru
      _
    // Predicated region
    $region30: #{value_forward.1} parent=1 // pred_check
      _
    $region31: #{value_forward.1} parent=1 // pred_check_branch
      %40 = sbr.rel (0) target = $region33
    $region32: #{value_forward.1} parent=1 // pred_region
      %42 = dma.done [#allocation4], 8192
    $region33: #{value_forward.1} parent=1 // pred_fallthru
      _
    %v43 = vld [vmem:[%s0] sm:$0xff]
    %v44 = vld [vmem:[%s0 + $0x8] sm:$0xff]
    %v45 = vld [vmem:[%s0 + $0x10] sm:$0xff]
    %v46 = vld [vmem:[%s0 + $0x18] sm:$0xff]
    %v47 = vld [vmem:[%s0 + $0x20] sm:$0xff]
    %v48 = vld [vmem:[%s0 + $0x28] sm:$0xff]
    %v49 = vld [vmem:[%s0 + $0x30] sm:$0xff]
    %v50 = vld [vmem:[%s0 + $0x38] sm:$0xff]
    %v51 = vld [vmem:[%s0 + $0x40] sm:$0xff]
    %v52 = vld [vmem:[%s0 + $0x48] sm:$0xff]
    %v53 = vld [vmem:[%s0 + $0x50] sm:$0xff]
    %v54 = vld [vmem:[%s0 + $0x58] sm:$0xff]
    %v55 = vld [vmem:[%s0 + $0x60] sm:$0xff]
    %v56 = vld [vmem:[%s0 + $0x68] sm:$0xff]
    %v57 = vld [vmem:[%s0 + $0x70] sm:$0xff]
    %v58 = vld [vmem:[%s0 + $0x78] sm:$0xff]
    %v59 = vld [vmem:[%s1] sm:$0xff]
    %v60 = vld [vmem:[%s1 + $0x8] sm:$0xff]
    %v61 = vld [vmem:[%s1 + $0x10] sm:$0xff]
    %v62 = vld [vmem:[%s1 + $0x18] sm:$0xff]
    %v63 = vld [vmem:[%s1 + $0x20] sm:$0xff]
    %v64 = vld [vmem:[%s1 + $0x28] sm:$0xff]
    %v65 = vld [vmem:[%s1 + $0x30] sm:$0xff]
    %v66 = vld [vmem:[%s1 + $0x38] sm:$0xff]
    %v67 = vld [vmem:[%s2] sm:$0x3]
    %v69 = vperm.slane %v67, 0
    %v70 = vperm.slane %v67, 1
    %vm73 = vcmask 261120
    %v75 = vsel %vm73, %v43, 0
    %v78 = vsel %vm73, %v44, 0
    %v81 = vsel %vm73, %v45, 0
    %v84 = vsel %vm73, %v46, 0
    %v87 = vsel %vm73, %v47, 0
    %v90 = vsel %vm73, %v48, 0
    %v93 = vsel %vm73, %v49, 0
    %v96 = vsel %vm73, %v50, 0
    %v99 = vsel %vm73, %v51, 0
    %v102 = vsel %vm73, %v52, 0
    %v105 = vsel %vm73, %v53, 0
    %v108 = vsel %vm73, %v54, 0
    %v111 = vsel %vm73, %v55, 0
    %v114 = vsel %vm73, %v56, 0
    %v117 = vsel %vm73, %v57, 0
    %v120 = vsel %vm73, %v58, 0
    %122 = vmatpush.msra.mxu0 0.0
    %123 = vmatpush.msra.mxu0 0.0
    %124 = vmatpush.msra.mxu0 0.0
    %125 = vmatpush.msra.mxu0 0.0
    %126 = vmatpush.msra.mxu0 0.0
    %127 = vmatpush.msra.mxu0 0.0
    %128 = vmatpush.msra.mxu0 0.0
    %129 = vmatpush.msra.mxu0 0.0
    %130 = vmatpush.msra.mxu0 0.0
    %131 = vmatpush.msra.mxu0 0.0
    %132 = vmatpush.msra.mxu0 0.0
    %133 = vmatpush.msra.mxu0 0.0
    %134 = vmatpush.msra.mxu0 %v65
    %135 = vmatpush.msra.mxu0 %v63
    %136 = vmatpush.msra.mxu0 %v61
    %137 = vmatpush.msra.mxu0 %v59
    %138 = vmatmul.f32.gmra.mxu0 %v75
    %v139 = vpop.f32.mrf.mxu0
    %v140 = vadd.f32 %v69, %v139
    %141 = vmatmul.f32.gmra.mxu0 %v78
    %v142 = vpop.f32.mrf.mxu0
    %v143 = vadd.f32 %v69, %v142
    %144 = vmatmul.f32.gmra.mxu0 %v81
    %v145 = vpop.f32.mrf.mxu0
    %v146 = vadd.f32 %v69, %v145
    %147 = vmatmul.f32.gmra.mxu0 %v84
    %v148 = vpop.f32.mrf.mxu0
    %v149 = vadd.f32 %v69, %v148
    %150 = vmatmul.f32.gmra.mxu0 %v87
    %v151 = vpop.f32.mrf.mxu0
    %v152 = vadd.f32 %v69, %v151
    %153 = vmatmul.f32.gmra.mxu0 %v90
    %v154 = vpop.f32.mrf.mxu0
    %v155 = vadd.f32 %v69, %v154
    %156 = vmatmul.f32.gmra.mxu0 %v93
    %v157 = vpop.f32.mrf.mxu0
    %v158 = vadd.f32 %v69, %v157
    %159 = vmatmul.f32.gmra.mxu0 %v96
    %v160 = vpop.f32.mrf.mxu0
    %v161 = vadd.f32 %v69, %v160
    %162 = vmatmul.f32.gmra.mxu0 %v99
    %v163 = vpop.f32.mrf.mxu0
    %v164 = vadd.f32 %v69, %v163
    %165 = vmatmul.f32.gmra.mxu0 %v102
    %v166 = vpop.f32.mrf.mxu0
    %v167 = vadd.f32 %v69, %v166
    %168 = vmatmul.f32.gmra.mxu0 %v105
    %v169 = vpop.f32.mrf.mxu0
    %v170 = vadd.f32 %v69, %v169
    %171 = vmatmul.f32.gmra.mxu0 %v108
    %v172 = vpop.f32.mrf.mxu0
    %v173 = vadd.f32 %v69, %v172
    %174 = vmatmul.f32.gmra.mxu0 %v111
    %v175 = vpop.f32.mrf.mxu0
    %v176 = vadd.f32 %v69, %v175
    %177 = vmatmul.f32.gmra.mxu0 %v114
    %v178 = vpop.f32.mrf.mxu0
    %v179 = vadd.f32 %v69, %v178
    %180 = vmatmul.f32.gmra.mxu0 %v117
    %v181 = vpop.f32.mrf.mxu0
    %v182 = vadd.f32 %v69, %v181
    %183 = vmatmul.f32.gmra.mxu0 %v120
    %v184 = vpop.f32.mrf.mxu0
    %v185 = vadd.f32 %v69, %v184
    %186 = vdwg.mxu0
    %187 = vmatpush.msra.mxu0 0.0
    %188 = vmatpush.msra.mxu0 0.0
    %189 = vmatpush.msra.mxu0 0.0
    %190 = vmatpush.msra.mxu0 0.0
    %191 = vmatpush.msra.mxu0 0.0
    %192 = vmatpush.msra.mxu0 0.0
    %193 = vmatpush.msra.mxu0 0.0
    %194 = vmatpush.msra.mxu0 0.0
    %195 = vmatpush.msra.mxu0 0.0
    %196 = vmatpush.msra.mxu0 0.0
    %197 = vmatpush.msra.mxu0 0.0
    %198 = vmatpush.msra.mxu0 0.0
    %199 = vmatpush.msra.mxu0 %v66
    %200 = vmatpush.msra.mxu0 %v64
    %201 = vmatpush.msra.mxu0 %v62
    %202 = vmatpush.msra.mxu0 %v60
    %203 = vmatmul.f32.gmra.mxu0 %v75
    %v204 = vpop.f32.mrf.mxu0
    %v205 = vadd.f32 %v70, %v204
    %206 = vmatmul.f32.gmra.mxu0 %v78
    %v207 = vpop.f32.mrf.mxu0
    %v208 = vadd.f32 %v70, %v207
    %209 = vmatmul.f32.gmra.mxu0 %v81
    %v210 = vpop.f32.mrf.mxu0
    %v211 = vadd.f32 %v70, %v210
    %212 = vmatmul.f32.gmra.mxu0 %v84
    %v213 = vpop.f32.mrf.mxu0
    %v214 = vadd.f32 %v70, %v213
    %215 = vmatmul.f32.gmra.mxu0 %v87
    %v216 = vpop.f32.mrf.mxu0
    %v217 = vadd.f32 %v70, %v216
    %218 = vmatmul.f32.gmra.mxu0 %v90
    %v219 = vpop.f32.mrf.mxu0
    %v220 = vadd.f32 %v70, %v219
    %221 = vmatmul.f32.gmra.mxu0 %v93
    %v222 = vpop.f32.mrf.mxu0
    %v223 = vadd.f32 %v70, %v222
    %224 = vmatmul.f32.gmra.mxu0 %v96
    %v225 = vpop.f32.mrf.mxu0
    %v226 = vadd.f32 %v70, %v225
    %227 = vmatmul.f32.gmra.mxu0 %v99
    %v228 = vpop.f32.mrf.mxu0
    %v229 = vadd.f32 %v70, %v228
    %230 = vmatmul.f32.gmra.mxu0 %v102
    %v231 = vpop.f32.mrf.mxu0
    %v232 = vadd.f32 %v70, %v231
    %233 = vmatmul.f32.gmra.mxu0 %v105
    %v234 = vpop.f32.mrf.mxu0
    %v235 = vadd.f32 %v70, %v234
    %236 = vmatmul.f32.gmra.mxu0 %v108
    %v237 = vpop.f32.mrf.mxu0
    %v238 = vadd.f32 %v70, %v237
    %239 = vmatmul.f32.gmra.mxu0 %v111
    %v240 = vpop.f32.mrf.mxu0
    %v241 = vadd.f32 %v70, %v240
    %242 = vmatmul.f32.gmra.mxu0 %v114
    %v243 = vpop.f32.mrf.mxu0
    %v244 = vadd.f32 %v70, %v243
    %245 = vmatmul.f32.gmra.mxu0 %v117
    %v246 = vpop.f32.mrf.mxu0
    %v247 = vadd.f32 %v70, %v246
    %248 = vmatmul.f32.gmra.mxu0 %v120
    %v249 = vpop.f32.mrf.mxu0
    %v250 = vadd.f32 %v70, %v249
    %251 = vdwg.mxu0
    %v252 = vtanh.pop %v140
    %v253 = vtanh.pop %v205
    %v254 = vtanh.pop %v143
    %v255 = vtanh.pop %v208
    %v256 = vtanh.pop %v146
    %v257 = vtanh.pop %v211
    %v258 = vtanh.pop %v149
    %v259 = vtanh.pop %v214
    %v260 = vtanh.pop %v152
    %v261 = vtanh.pop %v217
    %v262 = vtanh.pop %v155
    %v263 = vtanh.pop %v220
    %v264 = vtanh.pop %v158
    %v265 = vtanh.pop %v223
    %v266 = vtanh.pop %v161
    %v267 = vtanh.pop %v226
    %v268 = vtanh.pop %v164
    %v269 = vtanh.pop %v229
    %v270 = vtanh.pop %v167
    %v271 = vtanh.pop %v232
    %v272 = vtanh.pop %v170
    %v273 = vtanh.pop %v235
    %v274 = vtanh.pop %v173
    %v275 = vtanh.pop %v238
    %v276 = vtanh.pop %v176
    %v277 = vtanh.pop %v241
    %v278 = vtanh.pop %v179
    %v279 = vtanh.pop %v244
    %v280 = vtanh.pop %v182
    %v281 = vtanh.pop %v247
    %v282 = vtanh.pop %v185
    %v283 = vtanh.pop %v250
    %v284 = vld [vmem:[#allocation3] sm:$0xff]
    %v285 = vld [vmem:[#allocation3 + $0x8] sm:$0xff]
    %v286 = vld [vmem:[#allocation3 + $0x10] sm:$0xff]
    %v287 = vld [vmem:[#allocation3 + $0x18] sm:$0xff]
    %v288 = vld [vmem:[#allocation3 + $0x20] sm:$0xff]
    %v289 = vld [vmem:[#allocation3 + $0x28] sm:$0xff]
    %v290 = vld [vmem:[#allocation3 + $0x30] sm:$0xff]
    %v291 = vld [vmem:[#allocation3 + $0x38] sm:$0xff]
    %v292 = vld [vmem:[#allocation3 + $0x40] sm:$0xff]
    %v293 = vld [vmem:[#allocation3 + $0x48] sm:$0xff]
    %v294 = vld [vmem:[#allocation3 + $0x50] sm:$0xff]
    %v295 = vld [vmem:[#allocation3 + $0x58] sm:$0xff]
    %v296 = vld [vmem:[#allocation3 + $0x60] sm:$0xff]
    %v297 = vld [vmem:[#allocation3 + $0x68] sm:$0xff]
    %v298 = vld [vmem:[#allocation3 + $0x70] sm:$0xff]
    %v299 = vld [vmem:[#allocation3 + $0x78] sm:$0xff]
    %v300 = vld [vmem:[#allocation3 + $0x80] sm:$0xff]
    %v301 = vld [vmem:[#allocation3 + $0x88] sm:$0xff]
    %v302 = vld [vmem:[#allocation3 + $0x90] sm:$0xff]
    %v303 = vld [vmem:[#allocation3 + $0x98] sm:$0xff]
    %v304 = vld [vmem:[#allocation3 + $0xa0] sm:$0xff]
    %v305 = vld [vmem:[#allocation3 + $0xa8] sm:$0xff]
    %v306 = vld [vmem:[#allocation3 + $0xb0] sm:$0xff]
    %v307 = vld [vmem:[#allocation3 + $0xb8] sm:$0xff]
    %v308 = vld [vmem:[#allocation3 + $0xc0] sm:$0xff]
    %v309 = vld [vmem:[#allocation3 + $0xc8] sm:$0xff]
    %v310 = vld [vmem:[#allocation3 + $0xd0] sm:$0xff]
    %v311 = vld [vmem:[#allocation3 + $0xd8] sm:$0xff]
    %v312 = vld [vmem:[#allocation3 + $0xe0] sm:$0xff]
    %v313 = vld [vmem:[#allocation3 + $0xe8] sm:$0xff]
    %v314 = vld [vmem:[#allocation3 + $0xf0] sm:$0xff]
    %v315 = vld [vmem:[#allocation3 + $0xf8] sm:$0xff]
    %v316 = vld [vmem:[#allocation3 + $0x100] sm:$0xff]
    %v317 = vld [vmem:[#allocation3 + $0x108] sm:$0xff]
    %v318 = vld [vmem:[#allocation3 + $0x110] sm:$0xff]
    %v319 = vld [vmem:[#allocation3 + $0x118] sm:$0xff]
    %v320 = vld [vmem:[#allocation3 + $0x120] sm:$0xff]
    %v321 = vld [vmem:[#allocation3 + $0x128] sm:$0xff]
    %v322 = vld [vmem:[#allocation3 + $0x130] sm:$0xff]
    %v323 = vld [vmem:[#allocation3 + $0x138] sm:$0xff]
    %v324 = vld [vmem:[#allocation3 + $0x140] sm:$0xff]
    %v325 = vld [vmem:[#allocation3 + $0x148] sm:$0xff]
    %v326 = vld [vmem:[#allocation3 + $0x150] sm:$0xff]
    %v327 = vld [vmem:[#allocation3 + $0x158] sm:$0xff]
    %v328 = vld [vmem:[#allocation3 + $0x160] sm:$0xff]
    %v329 = vld [vmem:[#allocation3 + $0x168] sm:$0xff]
    %v330 = vld [vmem:[#allocation3 + $0x170] sm:$0xff]
    %v331 = vld [vmem:[#allocation3 + $0x178] sm:$0xff]
    %v332 = vld [vmem:[#allocation3 + $0x180] sm:$0xff]
    %v333 = vld [vmem:[#allocation3 + $0x188] sm:$0xff]
    %v334 = vld [vmem:[#allocation3 + $0x190] sm:$0xff]
    %v335 = vld [vmem:[#allocation3 + $0x198] sm:$0xff]
    %v336 = vld [vmem:[#allocation3 + $0x1a0] sm:$0xff]
    %v337 = vld [vmem:[#allocation3 + $0x1a8] sm:$0xff]
    %v338 = vld [vmem:[#allocation3 + $0x1b0] sm:$0xff]
    %v339 = vld [vmem:[#allocation3 + $0x1b8] sm:$0xff]
    %v340 = vld [vmem:[#allocation3 + $0x1c0] sm:$0xff]
    %v341 = vld [vmem:[#allocation3 + $0x1c8] sm:$0xff]
    %v342 = vld [vmem:[#allocation3 + $0x1d0] sm:$0xff]
    %v343 = vld [vmem:[#allocation3 + $0x1d8] sm:$0xff]
    %v344 = vld [vmem:[#allocation3 + $0x1e0] sm:$0xff]
    %v345 = vld [vmem:[#allocation3 + $0x1e8] sm:$0xff]
    %v346 = vld [vmem:[#allocation3 + $0x1f0] sm:$0xff]
    %v347 = vld [vmem:[#allocation3 + $0x1f8] sm:$0xff]
    %v348 = vld [vmem:[%s4] sm:$0x3]
    %v350 = vperm.slane %v348, 0
    %v351 = vperm.slane %v348, 1
    %354 = vmatpush.msra.mxu0 %v314
    %355 = vmatpush.msra.mxu0 %v312
    %356 = vmatpush.msra.mxu0 %v310
    %357 = vmatpush.msra.mxu0 %v308
    %358 = vmatpush.msra.mxu0 %v306
    %359 = vmatpush.msra.mxu0 %v304
    %360 = vmatpush.msra.mxu0 %v302
    %361 = vmatpush.msra.mxu0 %v300
    %362 = vmatpush.msra.mxu0 %v298
    %363 = vmatpush.msra.mxu0 %v296
    %364 = vmatpush.msra.mxu0 %v294
    %365 = vmatpush.msra.mxu0 %v292
    %366 = vmatpush.msra.mxu0 %v290
    %367 = vmatpush.msra.mxu0 %v288
    %368 = vmatpush.msra.mxu0 %v286
    %369 = vmatpush.msra.mxu0 %v284
    %370 = vmatmul.f32.gmra.mxu0 %v252
    %v371 = vpop.f32.mrf.mxu0
    %v372 = vadd.f32 %v350, %v371
    %373 = vmatmul.f32.gmra.mxu0 %v254
    %v374 = vpop.f32.mrf.mxu0
    %v375 = vadd.f32 %v350, %v374
    %376 = vmatmul.f32.gmra.mxu0 %v256
    %v377 = vpop.f32.mrf.mxu0
    %v378 = vadd.f32 %v350, %v377
    %379 = vmatmul.f32.gmra.mxu0 %v258
    %v380 = vpop.f32.mrf.mxu0
    %v381 = vadd.f32 %v350, %v380
    %382 = vmatmul.f32.gmra.mxu0 %v260
    %v383 = vpop.f32.mrf.mxu0
    %v384 = vadd.f32 %v350, %v383
    %385 = vmatmul.f32.gmra.mxu0 %v262
    %v386 = vpop.f32.mrf.mxu0
    %v387 = vadd.f32 %v350, %v386
    %388 = vmatmul.f32.gmra.mxu0 %v264
    %v389 = vpop.f32.mrf.mxu0
    %v390 = vadd.f32 %v350, %v389
    %391 = vmatmul.f32.gmra.mxu0 %v266
    %v392 = vpop.f32.mrf.mxu0
    %v393 = vadd.f32 %v350, %v392
    %394 = vmatmul.f32.gmra.mxu0 %v268
    %v395 = vpop.f32.mrf.mxu0
    %v396 = vadd.f32 %v350, %v395
    %397 = vmatmul.f32.gmra.mxu0 %v270
    %v398 = vpop.f32.mrf.mxu0
    %v399 = vadd.f32 %v350, %v398
    %400 = vmatmul.f32.gmra.mxu0 %v272
    %v401 = vpop.f32.mrf.mxu0
    %v402 = vadd.f32 %v350, %v401
    %403 = vmatmul.f32.gmra.mxu0 %v274
    %v404 = vpop.f32.mrf.mxu0
    %v405 = vadd.f32 %v350, %v404
    %406 = vmatmul.f32.gmra.mxu0 %v276
    %v407 = vpop.f32.mrf.mxu0
    %v408 = vadd.f32 %v350, %v407
    %409 = vmatmul.f32.gmra.mxu0 %v278
    %v410 = vpop.f32.mrf.mxu0
    %v411 = vadd.f32 %v350, %v410
    %412 = vmatmul.f32.gmra.mxu0 %v280
    %v413 = vpop.f32.mrf.mxu0
    %v414 = vadd.f32 %v350, %v413
    %415 = vmatmul.f32.gmra.mxu0 %v282
    %v416 = vpop.f32.mrf.mxu0
    %v417 = vadd.f32 %v350, %v416
    %418 = vdwg.mxu0
    %419 = vmatpush.msra.mxu0 %v346
    %420 = vmatpush.msra.mxu0 %v344
    %421 = vmatpush.msra.mxu0 %v342
    %422 = vmatpush.msra.mxu0 %v340
    %423 = vmatpush.msra.mxu0 %v338
    %424 = vmatpush.msra.mxu0 %v336
    %425 = vmatpush.msra.mxu0 %v334
    %426 = vmatpush.msra.mxu0 %v332
    %427 = vmatpush.msra.mxu0 %v330
    %428 = vmatpush.msra.mxu0 %v328
    %429 = vmatpush.msra.mxu0 %v326
    %430 = vmatpush.msra.mxu0 %v324
    %431 = vmatpush.msra.mxu0 %v322
    %432 = vmatpush.msra.mxu0 %v320
    %433 = vmatpush.msra.mxu0 %v318
    %434 = vmatpush.msra.mxu0 %v316
    %435 = vmatmul.f32.gmra.mxu0 %v253
    %v436 = vpop.f32.mrf.mxu0
    %v437 = vadd.f32 %v372, %v436
    %438 = vmatmul.f32.gmra.mxu0 %v255
    %v439 = vpop.f32.mrf.mxu0
    %v440 = vadd.f32 %v375, %v439
    %441 = vmatmul.f32.gmra.mxu0 %v257
    %v442 = vpop.f32.mrf.mxu0
    %v443 = vadd.f32 %v378, %v442
    %444 = vmatmul.f32.gmra.mxu0 %v259
    %v445 = vpop.f32.mrf.mxu0
    %v446 = vadd.f32 %v381, %v445
    %447 = vmatmul.f32.gmra.mxu0 %v261
    %v448 = vpop.f32.mrf.mxu0
    %v449 = vadd.f32 %v384, %v448
    %450 = vmatmul.f32.gmra.mxu0 %v263
    %v451 = vpop.f32.mrf.mxu0
    %v452 = vadd.f32 %v387, %v451
    %453 = vmatmul.f32.gmra.mxu0 %v265
    %v454 = vpop.f32.mrf.mxu0
    %v455 = vadd.f32 %v390, %v454
    %456 = vmatmul.f32.gmra.mxu0 %v267
    %v457 = vpop.f32.mrf.mxu0
    %v458 = vadd.f32 %v393, %v457
    %459 = vmatmul.f32.gmra.mxu0 %v269
    %v460 = vpop.f32.mrf.mxu0
    %v461 = vadd.f32 %v396, %v460
    %462 = vmatmul.f32.gmra.mxu0 %v271
    %v463 = vpop.f32.mrf.mxu0
    %v464 = vadd.f32 %v399, %v463
    %465 = vmatmul.f32.gmra.mxu0 %v273
    %v466 = vpop.f32.mrf.mxu0
    %v467 = vadd.f32 %v402, %v466
    %468 = vmatmul.f32.gmra.mxu0 %v275
    %v469 = vpop.f32.mrf.mxu0
    %v470 = vadd.f32 %v405, %v469
    %471 = vmatmul.f32.gmra.mxu0 %v277
    %v472 = vpop.f32.mrf.mxu0
    %v473 = vadd.f32 %v408, %v472
    %474 = vmatmul.f32.gmra.mxu0 %v279
    %v475 = vpop.f32.mrf.mxu0
    %v476 = vadd.f32 %v411, %v475
    %477 = vmatmul.f32.gmra.mxu0 %v281
    %v478 = vpop.f32.mrf.mxu0
    %v479 = vadd.f32 %v414, %v478
    %480 = vmatmul.f32.gmra.mxu0 %v283
    %v481 = vpop.f32.mrf.mxu0
    %v482 = vadd.f32 %v417, %v481
    %483 = vdwg.mxu0
    %484 = vmatpush.msra.mxu0 %v315
    %485 = vmatpush.msra.mxu0 %v313
    %486 = vmatpush.msra.mxu0 %v311
    %487 = vmatpush.msra.mxu0 %v309
    %488 = vmatpush.msra.mxu0 %v307
    %489 = vmatpush.msra.mxu0 %v305
    %490 = vmatpush.msra.mxu0 %v303
    %491 = vmatpush.msra.mxu0 %v301
    %492 = vmatpush.msra.mxu0 %v299
    %493 = vmatpush.msra.mxu0 %v297
    %494 = vmatpush.msra.mxu0 %v295
    %495 = vmatpush.msra.mxu0 %v293
    %496 = vmatpush.msra.mxu0 %v291
    %497 = vmatpush.msra.mxu0 %v289
    %498 = vmatpush.msra.mxu0 %v287
    %499 = vmatpush.msra.mxu0 %v285
    %500 = vmatmul.f32.gmra.mxu0 %v252
    %v501 = vpop.f32.mrf.mxu0
    %v502 = vadd.f32 %v351, %v501
    %503 = vmatmul.f32.gmra.mxu0 %v254
    %v504 = vpop.f32.mrf.mxu0
    %v505 = vadd.f32 %v351, %v504
    %506 = vmatmul.f32.gmra.mxu0 %v256
    %v507 = vpop.f32.mrf.mxu0
    %v508 = vadd.f32 %v351, %v507
    %509 = vmatmul.f32.gmra.mxu0 %v258
    %v510 = vpop.f32.mrf.mxu0
    %v511 = vadd.f32 %v351, %v510
    %512 = vmatmul.f32.gmra.mxu0 %v260
    %v513 = vpop.f32.mrf.mxu0
    %v514 = vadd.f32 %v351, %v513
    %515 = vmatmul.f32.gmra.mxu0 %v262
    %v516 = vpop.f32.mrf.mxu0
    %v517 = vadd.f32 %v351, %v516
    %518 = vmatmul.f32.gmra.mxu0 %v264
    %v519 = vpop.f32.mrf.mxu0
    %v520 = vadd.f32 %v351, %v519
    %521 = vmatmul.f32.gmra.mxu0 %v266
    %v522 = vpop.f32.mrf.mxu0
    %v523 = vadd.f32 %v351, %v522
    %524 = vmatmul.f32.gmra.mxu0 %v268
    %v525 = vpop.f32.mrf.mxu0
    %v526 = vadd.f32 %v351, %v525
    %527 = vmatmul.f32.gmra.mxu0 %v270
    %v528 = vpop.f32.mrf.mxu0
    %v529 = vadd.f32 %v351, %v528
    %530 = vmatmul.f32.gmra.mxu0 %v272
    %v531 = vpop.f32.mrf.mxu0
    %v532 = vadd.f32 %v351, %v531
    %533 = vmatmul.f32.gmra.mxu0 %v274
    %v534 = vpop.f32.mrf.mxu0
    %v535 = vadd.f32 %v351, %v534
    %536 = vmatmul.f32.gmra.mxu0 %v276
    %v537 = vpop.f32.mrf.mxu0
    %v538 = vadd.f32 %v351, %v537
    %539 = vmatmul.f32.gmra.mxu0 %v278
    %v540 = vpop.f32.mrf.mxu0
    %v541 = vadd.f32 %v351, %v540
    %542 = vmatmul.f32.gmra.mxu0 %v280
    %v543 = vpop.f32.mrf.mxu0
    %v544 = vadd.f32 %v351, %v543
    %545 = vmatmul.f32.gmra.mxu0 %v282
    %v546 = vpop.f32.mrf.mxu0
    %v547 = vadd.f32 %v351, %v546
    %548 = vdwg.mxu0
    %549 = vmatpush.msra.mxu0 %v347
    %550 = vmatpush.msra.mxu0 %v345
    %551 = vmatpush.msra.mxu0 %v343
    %552 = vmatpush.msra.mxu0 %v341
    %553 = vmatpush.msra.mxu0 %v339
    %554 = vmatpush.msra.mxu0 %v337
    %555 = vmatpush.msra.mxu0 %v335
    %556 = vmatpush.msra.mxu0 %v333
    %557 = vmatpush.msra.mxu0 %v331
    %558 = vmatpush.msra.mxu0 %v329
    %559 = vmatpush.msra.mxu0 %v327
    %560 = vmatpush.msra.mxu0 %v325
    %561 = vmatpush.msra.mxu0 %v323
    %562 = vmatpush.msra.mxu0 %v321
    %563 = vmatpush.msra.mxu0 %v319
    %564 = vmatpush.msra.mxu0 %v317
    %565 = vmatmul.f32.gmra.mxu0 %v253
    %v566 = vpop.f32.mrf.mxu0
    %v567 = vadd.f32 %v502, %v566
    %568 = vmatmul.f32.gmra.mxu0 %v255
    %v569 = vpop.f32.mrf.mxu0
    %v570 = vadd.f32 %v505, %v569
    %571 = vmatmul.f32.gmra.mxu0 %v257
    %v572 = vpop.f32.mrf.mxu0
    %v573 = vadd.f32 %v508, %v572
    %574 = vmatmul.f32.gmra.mxu0 %v259
    %v575 = vpop.f32.mrf.mxu0
    %v576 = vadd.f32 %v511, %v575
    %577 = vmatmul.f32.gmra.mxu0 %v261
    %v578 = vpop.f32.mrf.mxu0
    %v579 = vadd.f32 %v514, %v578
    %580 = vmatmul.f32.gmra.mxu0 %v263
    %v581 = vpop.f32.mrf.mxu0
    %v582 = vadd.f32 %v517, %v581
    %583 = vmatmul.f32.gmra.mxu0 %v265
    %v584 = vpop.f32.mrf.mxu0
    %v585 = vadd.f32 %v520, %v584
    %586 = vmatmul.f32.gmra.mxu0 %v267
    %v587 = vpop.f32.mrf.mxu0
    %v588 = vadd.f32 %v523, %v587
    %589 = vmatmul.f32.gmra.mxu0 %v269
    %v590 = vpop.f32.mrf.mxu0
    %v591 = vadd.f32 %v526, %v590
    %592 = vmatmul.f32.gmra.mxu0 %v271
    %v593 = vpop.f32.mrf.mxu0
    %v594 = vadd.f32 %v529, %v593
    %595 = vmatmul.f32.gmra.mxu0 %v273
    %v596 = vpop.f32.mrf.mxu0
    %v597 = vadd.f32 %v532, %v596
    %598 = vmatmul.f32.gmra.mxu0 %v275
    %v599 = vpop.f32.mrf.mxu0
    %v600 = vadd.f32 %v535, %v599
    %601 = vmatmul.f32.gmra.mxu0 %v277
    %v602 = vpop.f32.mrf.mxu0
    %v603 = vadd.f32 %v538, %v602
    %604 = vmatmul.f32.gmra.mxu0 %v279
    %v605 = vpop.f32.mrf.mxu0
    %v606 = vadd.f32 %v541, %v605
    %607 = vmatmul.f32.gmra.mxu0 %v281
    %v608 = vpop.f32.mrf.mxu0
    %v609 = vadd.f32 %v544, %v608
    %610 = vmatmul.f32.gmra.mxu0 %v283
    %v611 = vpop.f32.mrf.mxu0
    %v612 = vadd.f32 %v547, %v611
    %613 = vdwg.mxu0
    %v614 = vtanh.pop %v437
    %v615 = vtanh.pop %v567
    %v616 = vtanh.pop %v440
    %v617 = vtanh.pop %v570
    %v618 = vtanh.pop %v443
    %v619 = vtanh.pop %v573
    %v620 = vtanh.pop %v446
    %v621 = vtanh.pop %v576
    %v622 = vtanh.pop %v449
    %v623 = vtanh.pop %v579
    %v624 = vtanh.pop %v452
    %v625 = vtanh.pop %v582
    %v626 = vtanh.pop %v455
    %v627 = vtanh.pop %v585
    %v628 = vtanh.pop %v458
    %v629 = vtanh.pop %v588
    %v630 = vtanh.pop %v461
    %v631 = vtanh.pop %v591
    %v632 = vtanh.pop %v464
    %v633 = vtanh.pop %v594
    %v634 = vtanh.pop %v467
    %v635 = vtanh.pop %v597
    %v636 = vtanh.pop %v470
    %v637 = vtanh.pop %v600
    %v638 = vtanh.pop %v473
    %v639 = vtanh.pop %v603
    %v640 = vtanh.pop %v476
    %v641 = vtanh.pop %v606
    %v642 = vtanh.pop %v479
    %v643 = vtanh.pop %v609
    %v644 = vtanh.pop %v482
    %v645 = vtanh.pop %v612
    %v646 = vld [vmem:[%s5] sm:$0x3]
    %v648 = vperm.slane %v646, 0
    %v649 = vperm.slane %v646, 1
    %v652 = vmul.f32 %v614, %v648
    %v653 = vmul.f32 %v615, %v649
    %v654 = vmul.f32 %v616, %v648
    %v655 = vmul.f32 %v617, %v649
    %v656 = vmul.f32 %v618, %v648
    %v657 = vmul.f32 %v619, %v649
    %v658 = vmul.f32 %v620, %v648
    %v659 = vmul.f32 %v621, %v649
    %v660 = vmul.f32 %v622, %v648
    %v661 = vmul.f32 %v623, %v649
    %v662 = vmul.f32 %v624, %v648
    %v663 = vmul.f32 %v625, %v649
    %v664 = vmul.f32 %v626, %v648
    %v665 = vmul.f32 %v627, %v649
    %v666 = vmul.f32 %v628, %v648
    %v667 = vmul.f32 %v629, %v649
    %v668 = vmul.f32 %v630, %v648
    %v669 = vmul.f32 %v631, %v649
    %v670 = vmul.f32 %v632, %v648
    %v671 = vmul.f32 %v633, %v649
    %v672 = vmul.f32 %v634, %v648
    %v673 = vmul.f32 %v635, %v649
    %v674 = vmul.f32 %v636, %v648
    %v675 = vmul.f32 %v637, %v649
    %v676 = vmul.f32 %v638, %v648
    %v677 = vmul.f32 %v639, %v649
    %v678 = vmul.f32 %v640, %v648
    %v679 = vmul.f32 %v641, %v649
    %v680 = vmul.f32 %v642, %v648
    %v681 = vmul.f32 %v643, %v649
    %v682 = vmul.f32 %v644, %v648
    %v683 = vmul.f32 %v645, %v649
    %v684 = vadd.f32 %v652, %v653
    %685 = vadd.xlane.f32.xlu0 %v684
    %v686 = vpop.xlane.xlu0 %685
    %v687 = vadd.f32 %v654, %v655
    %688 = vadd.xlane.f32.xlu0 %v687
    %v689 = vpop.xlane.xlu0 %688
    %v690 = vadd.f32 %v656, %v657
    %691 = vadd.xlane.f32.xlu0 %v690
    %v692 = vpop.xlane.xlu0 %691
    %v693 = vadd.f32 %v658, %v659
    %694 = vadd.xlane.f32.xlu0 %v693
    %v695 = vpop.xlane.xlu0 %694
    %v696 = vadd.f32 %v660, %v661
    %697 = vadd.xlane.f32.xlu0 %v696
    %v698 = vpop.xlane.xlu0 %697
    %v699 = vadd.f32 %v662, %v663
    %700 = vadd.xlane.f32.xlu0 %v699
    %v701 = vpop.xlane.xlu0 %700
    %v702 = vadd.f32 %v664, %v665
    %703 = vadd.xlane.f32.xlu0 %v702
    %v704 = vpop.xlane.xlu0 %703
    %v705 = vadd.f32 %v666, %v667
    %706 = vadd.xlane.f32.xlu0 %v705
    %v707 = vpop.xlane.xlu0 %706
    %v708 = vadd.f32 %v668, %v669
    %709 = vadd.xlane.f32.xlu0 %v708
    %v710 = vpop.xlane.xlu0 %709
    %v711 = vadd.f32 %v670, %v671
    %712 = vadd.xlane.f32.xlu0 %v711
    %v713 = vpop.xlane.xlu0 %712
    %v714 = vadd.f32 %v672, %v673
    %715 = vadd.xlane.f32.xlu0 %v714
    %v716 = vpop.xlane.xlu0 %715
    %v717 = vadd.f32 %v674, %v675
    %718 = vadd.xlane.f32.xlu0 %v717
    %v719 = vpop.xlane.xlu0 %718
    %v720 = vadd.f32 %v676, %v677
    %721 = vadd.xlane.f32.xlu0 %v720
    %v722 = vpop.xlane.xlu0 %721
    %v723 = vadd.f32 %v678, %v679
    %724 = vadd.xlane.f32.xlu0 %v723
    %v725 = vpop.xlane.xlu0 %724
    %v726 = vadd.f32 %v680, %v681
    %727 = vadd.xlane.f32.xlu0 %v726
    %v728 = vpop.xlane.xlu0 %727
    %v729 = vadd.f32 %v682, %v683
    %730 = vadd.xlane.f32.xlu0 %v729
    %v731 = vpop.xlane.xlu0 %730
    %s732 = sld [smem:[#allocation2]]
    %v733 = vstv %s732
    %v734 = vadd.f32 %v686, %v733
    %v735 = vadd.f32 %v689, %v733
    %v736 = vadd.f32 %v692, %v733
    %v737 = vadd.f32 %v695, %v733
    %v738 = vadd.f32 %v698, %v733
    %v739 = vadd.f32 %v701, %v733
    %v740 = vadd.f32 %v704, %v733
    %v741 = vadd.f32 %v707, %v733
    %v742 = vadd.f32 %v710, %v733
    %v743 = vadd.f32 %v713, %v733
    %v744 = vadd.f32 %v716, %v733
    %v745 = vadd.f32 %v719, %v733
    %v746 = vadd.f32 %v722, %v733
    %v747 = vadd.f32 %v725, %v733
    %v748 = vadd.f32 %v728, %v733
    %v749 = vadd.f32 %v731, %v733
    %vm750 = vcmask 7168
    %751 = vst.msk [vmem:[%s7] sm:$0xff] %vm750, %v734
    %752 = vst.msk [vmem:[%s7 + $0x8] sm:$0xff] %vm750, %v735
    %753 = vst.msk [vmem:[%s7 + $0x10] sm:$0xff] %vm750, %v736
    %754 = vst.msk [vmem:[%s7 + $0x18] sm:$0xff] %vm750, %v737
    %755 = vst.msk [vmem:[%s7 + $0x20] sm:$0xff] %vm750, %v738
    %756 = vst.msk [vmem:[%s7 + $0x28] sm:$0xff] %vm750, %v739
    %757 = vst.msk [vmem:[%s7 + $0x30] sm:$0xff] %vm750, %v740
    %758 = vst.msk [vmem:[%s7 + $0x38] sm:$0xff] %vm750, %v741
    %759 = vst.msk [vmem:[%s7 + $0x40] sm:$0xff] %vm750, %v742
    %760 = vst.msk [vmem:[%s7 + $0x48] sm:$0xff] %vm750, %v743
    %761 = vst.msk [vmem:[%s7 + $0x50] sm:$0xff] %vm750, %v744
    %762 = vst.msk [vmem:[%s7 + $0x58] sm:$0xff] %vm750, %v745
    %763 = vst.msk [vmem:[%s7 + $0x60] sm:$0xff] %vm750, %v746
    %764 = vst.msk [vmem:[%s7 + $0x68] sm:$0xff] %vm750, %v747
    %765 = vst.msk [vmem:[%s7 + $0x70] sm:$0xff] %vm750, %v748
    %766 = vst.msk [vmem:[%s7 + $0x78] sm:$0xff] %vm750, %v749
    // Predicated region
    $region34: #{value_forward.1} parent=1 // pred_check
      _
    $region35: #{value_forward.1} parent=1 // pred_check_branch
      %768 = sbr.rel (0) target = $region37
    $region36: #{value_forward.1} parent=1 // pred_region
      _
    $region37: #{value_forward.1} parent=1 // pred_fallthru
      _
    // Predicated region
    $region38: #{value_forward.1} parent=1 // pred_check
      _
    $region39: #{value_forward.1} parent=1 // pred_check_branch
      %770 = sbr.rel (0) target = $region41
    $region40: #{value_forward.1} parent=1 // pred_region
      _
    $region41: #{value_forward.1} parent=1 // pred_fallthru
      _
    %771 = vsyncpa [#allocation4], 1

</llo_original>
